<compile_context>
chip_gen: v6e
topology: v6e:2x2x1
jax: 0.10.0
libtpu: 0.0.40
codegen_flags: <defaults>
</compile_context>

<pallas_src>
import functools

import jax
import jax.numpy as jnp
from jax import lax
from jax.experimental import pallas as pl
from jax.experimental.pallas import tpu as pltpu


def _mlp_kernel(m1_ref, b1_ref, m2_ref, b2_ref, x_ref, o_ref):
    """One batch tile; G samples per VMEM row (lane-grouped native layout).

    x_ref : (tile_rows, F*G) VMEM f32  -- native row-major x, G samples/row
    m1_ref: (F*G, H*G)       VMEM      -- kron(I_G, W1^T), block-diagonal
    b1_ref: (1, H*G)         VMEM f32  -- b1 tiled G times
    m2_ref: (H*G, G)         VMEM      -- kron(I_G, w2)
    b2_ref: (1, 1)           VMEM f32
    o_ref : (tile_rows, G)   VMEM f32  -- one scalar per sample
    """
    cdt = m1_ref.dtype                      # f32, or bf16 when bf16_matmul=True
    x = x_ref[...].astype(cdt)
    # Layer 1 on the MXU: per-sample (F -> H) dot via the block-diagonal M1.
    h = jnp.dot(x, m1_ref[...],
                preferred_element_type=jnp.float32,
                precision=lax.Precision.HIGHEST)
    h = jnp.maximum(h + b1_ref[...], 0.0)   # bias + ReLU on the VPU
    # Layer 2 on the MXU: per-sample (H -> 1) dot via the block-diagonal M2.
    y = jnp.dot(h.astype(cdt), m2_ref[...],
                preferred_element_type=jnp.float32,
                precision=lax.Precision.HIGHEST)
    o_ref[...] = y + b2_ref[...]


def _round_up(a, b):
    return (a + b - 1) // b * b


def _choose_tile_rows(n_rows, tile_rows):
    """Padding-aware tile chooser; also guarantees >=2 grid steps when possible."""
    tr = max(8, min(int(tile_rows), _round_up(n_rows, 8)))
    tr = (tr // 8) * 8
    # Ragged batches: shrink the tile until padded rows waste < ~12.5% of work.
    while tr > 8 and (_round_up(n_rows, tr) - n_rows) * 8 > n_rows:
        tr = max(8, (tr // 2 // 8) * 8)
    # >=2 grid steps: enables DMA/compute double-buffering and lets the
    # "parallel" batch axis split across v7x's two TensorCores.
    while tr > 8 and _round_up(n_rows, tr) // tr < 2:
        tr = max(8, (tr // 2 // 8) * 8)
    return tr, _round_up(n_rows, tr)


@functools.partial(jax.jit, static_argnames=("tile_rows", "group", "bf16_matmul"))
def nn_model1_forward(x, w1, b1, w2, b2, *, tile_rows=4096, group=16,
                      bf16_matmul=False):
    """x: (B, in_features) f32.
    w1: (5, in_features), b1: (5,), w2: (5,), b2: (1,)  (PyTorch orientation).
    Returns (B, 1) f32."""
    B, F = x.shape
    H = w1.shape[0]
    G = int(group)

    n_rows = pl.cdiv(B, G)                         # logical rows of G samples
    tr, n_rows_pad = _choose_tile_rows(n_rows, tile_rows)
    b_pad = n_rows_pad * G

    xf = x.astype(jnp.float32)
    if b_pad != B:
        # Single fused pad copy; the zero-copy fast path is B % (group*tile) == 0.
        xf = jnp.pad(xf, ((0, b_pad - B), (0, 0)))
    # Row-major reshape = bitcast (no HBM data reorder): sample s of row r
    # occupies lanes [s*F, (s+1)*F); each grid block is one contiguous HBM chunk.
    x_g = xf.reshape(n_rows_pad, F * G)

    # Expand the tiny PyTorch weights into per-row block-diagonal MXU operands
    # (built once per call; ~(F*G)*(H*G)*4 bytes = 25 KiB at the defaults).
    cdt = jnp.bfloat16 if bf16_matmul else jnp.float32
    eye_g = jnp.eye(G, dtype=jnp.float32)
    m1 = jnp.kron(eye_g, w1.astype(jnp.float32).T).astype(cdt)              # (F*G, H*G)
    m2 = jnp.kron(eye_g, w2.astype(jnp.float32).reshape(H, 1)).astype(cdt)  # (H*G, G)
    b1t = jnp.tile(b1.astype(jnp.float32), G).reshape(1, H * G)
    b2t = b2.astype(jnp.float32).reshape(1, 1)

    grid = (n_rows_pad // tr,)

    out = pl.pallas_call(
        _mlp_kernel,
        out_shape=jax.ShapeDtypeStruct((n_rows_pad, G), jnp.float32),
        grid=grid,
        in_specs=[
            pl.BlockSpec((F * G, H * G), lambda i: (0, 0)),   # M1: VMEM-resident
            pl.BlockSpec((1, H * G), lambda i: (0, 0)),       # b1 tiled
            pl.BlockSpec((H * G, G), lambda i: (0, 0)),       # M2: VMEM-resident
            pl.BlockSpec((1, 1), lambda i: (0, 0)),           # b2
            pl.BlockSpec((tr, F * G), lambda i: (i, 0)),      # x tile (contiguous HBM)
        ],
        out_specs=pl.BlockSpec((tr, G), lambda i: (i, 0)),
        compiler_params=pltpu.CompilerParams(
            dimension_semantics=("parallel",),        # batch tiles are independent
            vmem_limit_bytes=32 * 1024 * 1024,        # headroom if tile_rows grows
        ),
    )(m1, b1t, m2, b2t, x_g)

    # Back to the PyTorch-facing (B, 1) layout (row-major reshape + row slice).
    return out.reshape(b_pad, 1)[:B]


def init_params(key, in_features=5, hidden=5):
    """Deterministic init mimicking PyTorch nn.Linear default
    (uniform +/- 1/sqrt(fan_in)); weights kept in PyTorch (out, in) layout."""
    k1, k2, k3, k4 = jax.random.split(key, 4)
    bound1 = 1.0 / float(in_features) ** 0.5
    bound2 = 1.0 / float(hidden) ** 0.5
    w1 = jax.random.uniform(k1, (hidden, in_features), jnp.float32, -bound1, bound1)
    b1 = jax.random.uniform(k2, (hidden,), jnp.float32, -bound1, bound1)
    w2 = jax.random.uniform(k3, (hidden,), jnp.float32, -bound2, bound2)  # (1,hidden) row 0
    b2 = jax.random.uniform(k4, (1,), jnp.float32, -bound2, bound2)
    return w1, b1, w2, b2


def reference_forward(x, w1, b1, w2, b2):
    # Pure elementwise/VPU reference (no MXU precision ambiguity): exact f32.
    h = jnp.maximum(jnp.sum(x[:, None, :] * w1[None, :, :], axis=-1) + b1, 0.0)
    return jnp.sum(h * w2[None, :], axis=-1, keepdims=True) + b2


if __name__ == "__main__":
    key = jax.random.PRNGKey(0)
    k_x, k_x2, k_x3, k_p = jax.random.split(key, 4)

    in_features = 5
    w1, b1, w2, b2 = init_params(k_p, in_features=in_features)

    # Small case matching the module's typical use (single tile).
    batch = 8
    x = jax.random.normal(k_x, (batch, in_features), jnp.float32)
    y = jax.block_until_ready(nn_model1_forward(x, w1, b1, w2, b2))
    y_ref = reference_forward(x, w1, b1, w2, b2)
    assert y.shape == (batch, 1)
    assert jnp.allclose(y, y_ref, atol=1e-4, rtol=1e-4), "mismatch vs reference (B=8)"

    # Aligned multi-tile case: zero-copy reshape path, >=2 grid steps.
    batch2 = 4096
    x2 = jax.random.normal(k_x2, (batch2, in_features), jnp.float32)
    y2 = jax.block_until_ready(nn_model1_forward(x2, w1, b1, w2, b2))
    y2_ref = reference_forward(x2, w1, b1, w2, b2)
    assert y2.shape == (batch2, 1)
    assert jnp.allclose(y2, y2_ref, atol=1e-4, rtol=1e-4), "mismatch vs reference (B=4096)"

    # Ragged case: exercises the pad path + padding-aware tile chooser + grid.
    batch3 = 2500
    x3 = jax.random.normal(k_x3, (batch3, in_features), jnp.float32)
    y3 = jax.block_until_ready(nn_model1_forward(x3, w1, b1, w2, b2, tile_rows=16))
    y3_ref = reference_forward(x3, w1, b1, w2, b2)
    assert y3.shape == (batch3, 1)
    assert jnp.allclose(y3, y3_ref, atol=1e-4, rtol=1e-4), "mismatch vs reference (B=2500)"

    print("KERNEL_OK")
</pallas_src>

<mosaic_0001>
module attributes {stable_mosaic.version = 11 : i64} {
  func.func @_mlp_kernel(%arg0: i32, %arg1: memref<80x80xf32, #tpu.memory_space<vmem>>, %arg2: memref<1x80xf32, #tpu.memory_space<vmem>>, %arg3: memref<80x16xf32, #tpu.memory_space<vmem>>, %arg4: memref<1x1xf32, #tpu.memory_space<vmem>>, %arg5: memref<8x80xf32, #tpu.memory_space<vmem>>, %arg6: memref<8x16xf32, #tpu.memory_space<vmem>>) attributes {dimension_semantics = [#tpu.dimension_semantics<parallel>], iteration_bounds = array<i64: 1>, scalar_prefetch = 0 : i64, scratch_operands = 0 : i64, tpu.core_type = #tpu.core_type<tc>, window_params = [{pipeline_mode = #tpu.pipeline_mode<synchronous>, transform_indices = @transform_0, window_bounds = array<i64: 80, 80>}, {pipeline_mode = #tpu.pipeline_mode<synchronous>, transform_indices = @transform_1, window_bounds = array<i64: 1, 80>}, {pipeline_mode = #tpu.pipeline_mode<synchronous>, transform_indices = @transform_2, window_bounds = array<i64: 80, 16>}, {pipeline_mode = #tpu.pipeline_mode<synchronous>, transform_indices = @transform_3, window_bounds = array<i64: 1, 1>}, {transform_indices = @transform_4, window_bounds = array<i64: 8, 80>}, {transform_indices = @transform_5, window_bounds = array<i64: 8, 16>}]} {
    %c0 = arith.constant 0 : index
    %c0_0 = arith.constant 0 : index
    %0 = vector.load %arg5[%c0, %c0_0] : memref<8x80xf32, #tpu.memory_space<vmem>>, vector<8x80xf32>
    %c0_1 = arith.constant 0 : index
    %c0_2 = arith.constant 0 : index
    %1 = vector.load %arg1[%c0_1, %c0_2] : memref<80x80xf32, #tpu.memory_space<vmem>>, vector<80x80xf32>
    %cst = arith.constant dense<0.000000e+00> : vector<8x80xf32>
    %2 = tpu.matmul %0, %1, %cst {dimension_numbers = #tpu.dot_dimension_numbers<[1], [0], [0], [1], [0, 0, 1, 1], [], []>, precision = #tpu.contract_precision<fp32>} : vector<8x80xf32>, vector<80x80xf32>, vector<8x80xf32> -> vector<8x80xf32>
    %c0_3 = arith.constant 0 : index
    %c0_4 = arith.constant 0 : index
    %3 = vector.load %arg2[%c0_3, %c0_4] : memref<1x80xf32, #tpu.memory_space<vmem>>, vector<1x80xf32>
    %4 = vector.broadcast %3 : vector<1x80xf32> to vector<8x80xf32>
    %5 = arith.addf %2, %4 : vector<8x80xf32>
    %cst_5 = arith.constant 0.000000e+00 : f32
    %6 = vector.broadcast %cst_5 : f32 to vector<8x80xf32>
    %7 = arith.maximumf %5, %6 : vector<8x80xf32>
    %c0_6 = arith.constant 0 : index
    %c0_7 = arith.constant 0 : index
    %8 = vector.load %arg3[%c0_6, %c0_7] : memref<80x16xf32, #tpu.memory_space<vmem>>, vector<80x16xf32>
    %cst_8 = arith.constant dense<0.000000e+00> : vector<8x16xf32>
    %9 = tpu.matmul %7, %8, %cst_8 {dimension_numbers = #tpu.dot_dimension_numbers<[1], [0], [0], [1], [0, 0, 1, 1], [], []>, precision = #tpu.contract_precision<fp32>} : vector<8x80xf32>, vector<80x16xf32>, vector<8x16xf32> -> vector<8x16xf32>
    %c0_9 = arith.constant 0 : index
    %c0_10 = arith.constant 0 : index
    %10 = vector.load %arg4[%c0_9, %c0_10] : memref<1x1xf32, #tpu.memory_space<vmem>>, vector<1x1xf32>
    %11 = vector.broadcast %10 : vector<1x1xf32> to vector<8x16xf32>
    %12 = arith.addf %9, %11 : vector<8x16xf32>
    %c0_11 = arith.constant 0 : index
    %c0_12 = arith.constant 0 : index
    %13 = vector.load %arg6[%c0_11, %c0_12] : memref<8x16xf32, #tpu.memory_space<vmem>>, vector<8x16xf32>
    tpu.vector_store %arg6[%c0_11, %c0_12], %12 {strides = array<i32>} : memref<8x16xf32, #tpu.memory_space<vmem>>, vector<8x16xf32>,
    return
  }
  func.func @transform_0(%arg0: i32) -> (i32, i32) {
    %c0_i32 = arith.constant 0 : i32
    %c0_i32_0 = arith.constant 0 : i32
    %c0_i32_1 = arith.constant 0 : i32
    return %c0_i32, %c0_i32_0 : i32, i32
  }
  func.func @transform_1(%arg0: i32) -> (i32, i32) {
    %c0_i32 = arith.constant 0 : i32
    %c0_i32_0 = arith.constant 0 : i32
    %c0_i32_1 = arith.constant 0 : i32
    return %c0_i32, %c0_i32_0 : i32, i32
  }
  func.func @transform_2(%arg0: i32) -> (i32, i32) {
    %c0_i32 = arith.constant 0 : i32
    %c0_i32_0 = arith.constant 0 : i32
    %c0_i32_1 = arith.constant 0 : i32
    return %c0_i32, %c0_i32_0 : i32, i32
  }
  func.func @transform_3(%arg0: i32) -> (i32, i32) {
    %c0_i32 = arith.constant 0 : i32
    %c0_i32_0 = arith.constant 0 : i32
    %c0_i32_1 = arith.constant 0 : i32
    return %c0_i32, %c0_i32_0 : i32, i32
  }
  func.func @transform_4(%arg0: i32) -> (i32, i32) {
    %c0_i32 = arith.constant 0 : i32
    %c0_i32_0 = arith.constant 0 : i32
    return %arg0, %c0_i32 : i32, i32
  }
  func.func @transform_5(%arg0: i32) -> (i32, i32) {
    %c0_i32 = arith.constant 0 : i32
    %c0_i32_0 = arith.constant 0 : i32
    return %arg0, %c0_i32 : i32, i32
  }
}

</mosaic_0001>

<llo_original>
// kernel: tile.9
$region0: #{tile.9}
  %s0 = inlined_call_operand.vmem [shape: f32[16,5], index: 0, kind: input, shape index: {}]
  %s1 = inlined_call_operand.vmem [shape: f32[1,80], index: 1, kind: output, shape index: {}]
  $region1: #{tile.9} parent=0
    #allocation0 [shape = 'u8[4096]{0}', space=vmem, size = 0x1000, scoped, tag = 'scoped mem for output reshape']
    %v2 = vld [vmem:[%s0] sm:$0x1]
    %vm3 = vcmask 39936
    %4 = vst.msk [vmem:[#allocation0] sm:$0x1] %vm3, %v2
    %s5 = scalar_lea.vmem %s0, 15
    %v6 = vld [vmem:[%s5] sm:$0x1]
    %7 = vrot.lane.b32.xlu0 %v6, 75
    %v8 = vpop.permute.xlu0 %7
    %vm9 = vcmask 654936
    %10 = vst.msk [vmem:[#allocation0] sm:$0x1] %vm9, %v8
    %s11 = scalar_lea.vmem %s0, 14
    %v12 = vld [vmem:[%s11] sm:$0x1]
    %13 = vrot.lane.b32.xlu0 %v12, 70
    %v14 = vpop.permute.xlu0 %13
    %vm15 = vcmask 613936
    %16 = vst.msk [vmem:[#allocation0] sm:$0x1] %vm15, %v14
    %s17 = scalar_lea.vmem %s0, 13
    %v18 = vld [vmem:[%s17] sm:$0x1]
    %19 = vrot.lane.b32.xlu0 %v18, 65
    %v20 = vpop.permute.xlu0 %19
    %vm21 = vcmask 572936
    %22 = vst.msk [vmem:[#allocation0] sm:$0x1] %vm21, %v20
    %s23 = scalar_lea.vmem %s0, 12
    %v24 = vld [vmem:[%s23] sm:$0x1]
    %25 = vrot.lane.b32.xlu0 %v24, 60
    %v26 = vpop.permute.xlu0 %25
    %vm27 = vcmask 531936
    %28 = vst.msk [vmem:[#allocation0] sm:$0x1] %vm27, %v26
    %s29 = scalar_lea.vmem %s0, 11
    %v30 = vld [vmem:[%s29] sm:$0x1]
    %31 = vrot.lane.b32.xlu0 %v30, 55
    %v32 = vpop.permute.xlu0 %31
    %vm33 = vcmask 490936
    %34 = vst.msk [vmem:[#allocation0] sm:$0x1] %vm33, %v32
    %s35 = scalar_lea.vmem %s0, 10
    %v36 = vld [vmem:[%s35] sm:$0x1]
    %37 = vrot.lane.b32.xlu0 %v36, 50
    %v38 = vpop.permute.xlu0 %37
    %vm39 = vcmask 449936
    %40 = vst.msk [vmem:[#allocation0] sm:$0x1] %vm39, %v38
    %s41 = scalar_lea.vmem %s0, 9
    %v42 = vld [vmem:[%s41] sm:$0x1]
    %43 = vrot.lane.b32.xlu0 %v42, 45
    %v44 = vpop.permute.xlu0 %43
    %vm45 = vcmask 408936
    %46 = vst.msk [vmem:[#allocation0] sm:$0x1] %vm45, %v44
    %s47 = scalar_lea.vmem %s0, 8
    %v48 = vld [vmem:[%s47] sm:$0x1]
    %49 = vrot.lane.b32.xlu0 %v48, 40
    %v50 = vpop.permute.xlu0 %49
    %vm51 = vcmask 367936
    %52 = vst.msk [vmem:[#allocation0] sm:$0x1] %vm51, %v50
    %s53 = scalar_lea.vmem %s0, 7
    %v54 = vld [vmem:[%s53] sm:$0x1]
    %55 = vrot.lane.b32.xlu0 %v54, 35
    %v56 = vpop.permute.xlu0 %55
    %vm57 = vcmask 326936
    %58 = vst.msk [vmem:[#allocation0] sm:$0x1] %vm57, %v56
    %s59 = scalar_lea.vmem %s0, 6
    %v60 = vld [vmem:[%s59] sm:$0x1]
    %61 = vrot.lane.b32.xlu0 %v60, 30
    %v62 = vpop.permute.xlu0 %61
    %vm63 = vcmask 285936
    %64 = vst.msk [vmem:[#allocation0] sm:$0x1] %vm63, %v62
    %s65 = scalar_lea.vmem %s0, 5
    %v66 = vld [vmem:[%s65] sm:$0x1]
    %67 = vrot.lane.b32.xlu0 %v66, 25
    %v68 = vpop.permute.xlu0 %67
    %vm69 = vcmask 244936
    %70 = vst.msk [vmem:[#allocation0] sm:$0x1] %vm69, %v68
    %s71 = scalar_lea.vmem %s0, 4
    %v72 = vld [vmem:[%s71] sm:$0x1]
    %73 = vrot.lane.b32.xlu0 %v72, 20
    %v74 = vpop.permute.xlu0 %73
    %vm75 = vcmask 203936
    %76 = vst.msk [vmem:[#allocation0] sm:$0x1] %vm75, %v74
    %s77 = scalar_lea.vmem %s0, 3
    %v78 = vld [vmem:[%s77] sm:$0x1]
    %79 = vrot.lane.b32.xlu0 %v78, 15
    %v80 = vpop.permute.xlu0 %79
    %vm81 = vcmask 162936
    %82 = vst.msk [vmem:[#allocation0] sm:$0x1] %vm81, %v80
    %s83 = scalar_lea.vmem %s0, 2
    %v84 = vld [vmem:[%s83] sm:$0x1]
    %85 = vrot.lane.b32.xlu0 %v84, 10
    %v86 = vpop.permute.xlu0 %85
    %vm87 = vcmask 121936
    %88 = vst.msk [vmem:[#allocation0] sm:$0x1] %vm87, %v86
    %s89 = scalar_lea.vmem %s0, 1
    %v90 = vld [vmem:[%s89] sm:$0x1]
    %91 = vrot.lane.b32.xlu0 %v90, 5
    %v92 = vpop.permute.xlu0 %91
    %vm93 = vcmask 80936
    %94 = vst.msk [vmem:[#allocation0] sm:$0x1] %vm93, %v92
    %s96 = sshll.u32 1, 1
    %s97 = ssub.s32 %s96, 1
    %v99 = vld [vmem:[#allocation0] sm:%s97]
    %s100 = sshll.u32 1, 1
    %s101 = ssub.s32 %s100, 1
    %102 = vst [vmem:[%s1] sm:%s101] %v99

// kernel: nn_model1_forward.1
$region0: #{nn_model1_forward.1}
  #allocation0 [shape = 'u32[]', space=smem, size = 0x4, offset = 0x4, fixed_abs, tag = 'smem constant byte address 0x4 - core index']
  #allocation1 [shape = 'u32[144,128]{1,0:T(1,128)}', space=vmem, size = 0x12000, scoped, tag = 'internal scratch']
  #allocation2 [shape = 'f32[1,1]{1,0:T(1,128)S(1)}', space=vmem, size = 0x200, scoped, tag = 'scoped memory for nn_model1_forward.1']
  %s0 = inlined_call_operand.vmem [shape: f32[80,80], index: 0, kind: input, shape index: {}]
  %s1 = inlined_call_operand.vmem [shape: f32[1,80], index: 1, kind: input, shape index: {}]
  %s2 = inlined_call_operand.vmem [shape: f32[80,16], index: 2, kind: input, shape index: {}]
  %s3 = inlined_call_operand.<no memory space> [shape: f32[1,1], index: 3, kind: input, shape index: {}]
  %s4 = inlined_call_operand.vmem [shape: f32[8,80], index: 4, kind: input, shape index: {}]
  %s5 = inlined_call_operand.vmem [shape: f32[8,16], index: 5, kind: output, shape index: {}]
  %s6 = sld [smem:[#allocation0]]
  $region30: #{nn_model1_forward.1} parent=0
    _
  %s8 = ssub.s32 1, %s6
  %s9 = scalar_select 0, %s8, %s6
  %v10 = vstv %s3
  %11 = vst [vmem:[#allocation2] sm:$0x1] %v10
  // Predicated region
  $region2: #{nn_model1_forward.1} parent=0 // pred_check
    _
  $region3: #{nn_model1_forward.1} parent=0 // pred_check_branch
    %13 = sbr.rel (0) target = $region5
  $region4: #{nn_model1_forward.1} parent=0 // pred_region
    _
  $region5: #{nn_model1_forward.1} parent=0 // pred_fallthru
    _
  // Predicated region
  $region6: #{nn_model1_forward.1} parent=0 // pred_check
    _
  $region7: #{nn_model1_forward.1} parent=0 // pred_check_branch
    %15 = sbr.rel (0) target = $region9
  $region8: #{nn_model1_forward.1} parent=0 // pred_region
    _
  $region9: #{nn_model1_forward.1} parent=0 // pred_fallthru
    _
  // Predicated region
  $region10: #{nn_model1_forward.1} parent=0 // pred_check
    _
  $region11: #{nn_model1_forward.1} parent=0 // pred_check_branch
    %17 = sbr.rel (0) target = $region13
  $region12: #{nn_model1_forward.1} parent=0 // pred_region
    _
  $region13: #{nn_model1_forward.1} parent=0 // pred_fallthru
    _
  // Predicated region
  $region14: #{nn_model1_forward.1} parent=0 // pred_check
    _
  $region15: #{nn_model1_forward.1} parent=0 // pred_check_branch
    %19 = sbr.rel (0) target = $region17
  $region16: #{nn_model1_forward.1} parent=0 // pred_region
    _
  $region17: #{nn_model1_forward.1} parent=0 // pred_fallthru
    _
  // Predicated region
  $region18: #{nn_model1_forward.1} parent=0 // pred_check
    _
  $region19: #{nn_model1_forward.1} parent=0 // pred_check_branch
    %21 = sbr.rel (0) target = $region21
  $region20: #{nn_model1_forward.1} parent=0 // pred_region
    _
  $region21: #{nn_model1_forward.1} parent=0 // pred_fallthru
    _
  %v22 = vld [vmem:[%s4] sm:$0xff]
  %v23 = vld [vmem:[%s0] sm:$0xff]
  %v24 = vld [vmem:[%s0 + $0x8] sm:$0xff]
  %v25 = vld [vmem:[%s0 + $0x10] sm:$0xff]
  %v26 = vld [vmem:[%s0 + $0x18] sm:$0xff]
  %v27 = vld [vmem:[%s0 + $0x20] sm:$0xff]
  %v28 = vld [vmem:[%s0 + $0x28] sm:$0xff]
  %v29 = vld [vmem:[%s0 + $0x30] sm:$0xff]
  %v30 = vld [vmem:[%s0 + $0x38] sm:$0xff]
  %v31 = vld [vmem:[%s0 + $0x40] sm:$0xff]
  %v32 = vld [vmem:[%s0 + $0x48] sm:$0xff]
  %v33 = vld [vmem:[%s1] sm:$0x1]
  %v35 = vlaneseq
  %v36 = vshrl.u32 %v35, 7
  %v37 = vsub.s32 0, %v36
  %v38 = vrot.slane %v33, %v37
  %vm40 = vcmask 654336
  %v42 = vsel %vm40, %v22, 0
  %44 = vmatprep.subr.mxu0 0.0
  %45 = vmatpush1.msra.mxu0 0.0
  %46 = vmatprep.subr.mxu0 0.0
  %47 = vmatpush1.msra.mxu0 0.0
  %48 = vmatprep.subr.mxu0 0.0
  %49 = vmatpush1.msra.mxu0 0.0
  %50 = vmatprep.subr.mxu0 0.0
  %51 = vmatpush1.msra.mxu0 0.0
  %52 = vmatprep.subr.mxu0 0.0
  %53 = vmatpush1.msra.mxu0 0.0
  %54 = vmatprep.subr.mxu0 0.0
  %55 = vmatpush1.msra.mxu0 0.0
  %56 = vmatprep.subr.mxu0 0.0
  %v57 = vand.u32 %v32, 4294901760
  %58 = vmatpush1.msra.mxu0 %v57
  %59 = vmatprep.subr.mxu0 0.0
  %v60 = vand.u32 %v31, 4294901760
  %61 = vmatpush1.msra.mxu0 %v60
  %62 = vmatprep.subr.mxu0 0.0
  %v63 = vand.u32 %v30, 4294901760
  %64 = vmatpush1.msra.mxu0 %v63
  %65 = vmatprep.subr.mxu0 0.0
  %v66 = vand.u32 %v29, 4294901760
  %67 = vmatpush1.msra.mxu0 %v66
  %68 = vmatprep.subr.mxu0 0.0
  %v69 = vand.u32 %v28, 4294901760
  %70 = vmatpush1.msra.mxu0 %v69
  %71 = vmatprep.subr.mxu0 0.0
  %v72 = vand.u32 %v27, 4294901760
  %73 = vmatpush1.msra.mxu0 %v72
  %74 = vmatprep.subr.mxu0 0.0
  %v75 = vand.u32 %v26, 4294901760
  %76 = vmatpush1.msra.mxu0 %v75
  %77 = vmatprep.subr.mxu0 0.0
  %v78 = vand.u32 %v25, 4294901760
  %79 = vmatpush1.msra.mxu0 %v78
  %80 = vmatprep.subr.mxu0 0.0
  %v81 = vand.u32 %v24, 4294901760
  %82 = vmatpush1.msra.mxu0 %v81
  %83 = vmatprep.subr.mxu0 0.0
  %v84 = vand.u32 %v23, 4294901760
  %85 = vmatpush1.msra.mxu0 %v84
  %86 = vmatprep.subr.mxu0 0.0
  %87 = vmatpush2.msra.mxu0 0.0
  %88 = vmatprep.subr.mxu0 0.0
  %89 = vmatpush2.msra.mxu0 0.0
  %90 = vmatprep.subr.mxu0 0.0
  %91 = vmatpush2.msra.mxu0 0.0
  %92 = vmatprep.subr.mxu0 0.0
  %93 = vmatpush2.msra.mxu0 0.0
  %94 = vmatprep.subr.mxu0 0.0
  %95 = vmatpush2.msra.mxu0 0.0
  %96 = vmatprep.subr.mxu0 0.0
  %97 = vmatpush2.msra.mxu0 0.0
  %98 = vmatprep.subr.mxu0 0.0
  %99 = vmatpush2.msra.mxu0 0.0
  %100 = vmatprep.subr.mxu0 0.0
  %101 = vmatpush2.msra.mxu0 0.0
  %102 = vmatprep.subr.mxu0 0.0
  %103 = vmatpush2.msra.mxu0 0.0
  %104 = vmatprep.subr.mxu0 0.0
  %105 = vmatpush2.msra.mxu0 0.0
  %106 = vmatprep.subr.mxu0 0.0
  %107 = vmatpush2.msra.mxu0 0.0
  %108 = vmatprep.subr.mxu0 0.0
  %109 = vmatpush2.msra.mxu0 0.0
  %110 = vmatprep.subr.mxu0 0.0
  %111 = vmatpush2.msra.mxu0 0.0
  %112 = vmatprep.subr.mxu0 0.0
  %113 = vmatpush2.msra.mxu0 0.0
  %114 = vmatprep.subr.mxu0 0.0
  %115 = vmatpush2.msra.mxu0 0.0
  %116 = vmatprep.subr.mxu0 0.0
  %117 = vmatpush2.msra.mxu0 0.0
  %118 = vmatprep.mubr.f32.mxu0 0.0
  %v119 = vand.u32 %v42, 4294901760
  %v120 = vsub.f32 %v42, %v119
  %v121 = vand.u32 %v120, 4294901760
  %v122 = vsub.f32 %v120, %v121
  %v123 = vand.u32 %v122, 4294901760
  %124 = vmatmul.mubr.f32.gmra.mxu0 %v123
  %v125 = vpop.f32.mrf.mxu0
  %v126 = vadd.f32 %v38, %v125
  %v127 = vpop.f32.mrf.mxu0
  %128 = vdwg.mxu0
  %129 = vmatprep.subr.mxu0 0.0
  %130 = vmatpush1.msra.mxu0 0.0
  %131 = vmatprep.subr.mxu0 0.0
  %132 = vmatpush1.msra.mxu0 0.0
  %133 = vmatprep.subr.mxu0 0.0
  %134 = vmatpush1.msra.mxu0 0.0
  %135 = vmatprep.subr.mxu0 0.0
  %136 = vmatpush1.msra.mxu0 0.0
  %137 = vmatprep.subr.mxu0 0.0
  %138 = vmatpush1.msra.mxu0 0.0
  %139 = vmatprep.subr.mxu0 0.0
  %140 = vmatpush1.msra.mxu0 0.0
  %141 = vmatprep.subr.mxu0 0.0
  %v142 = vand.u32 %v32, 4294901760
  %v143 = vsub.f32 %v32, %v142
  %v144 = vand.u32 %v143, 4294901760
  %v145 = vsub.f32 %v143, %v144
  %v146 = vand.u32 %v145, 4294901760
  %147 = vmatpush1.msra.mxu0 %v146
  %148 = vmatprep.subr.mxu0 0.0
  %v149 = vand.u32 %v31, 4294901760
  %v150 = vsub.f32 %v31, %v149
  %v151 = vand.u32 %v150, 4294901760
  %v152 = vsub.f32 %v150, %v151
  %v153 = vand.u32 %v152, 4294901760
  %154 = vmatpush1.msra.mxu0 %v153
  %155 = vmatprep.subr.mxu0 0.0
  %v156 = vand.u32 %v30, 4294901760
  %v157 = vsub.f32 %v30, %v156
  %v158 = vand.u32 %v157, 4294901760
  %v159 = vsub.f32 %v157, %v158
  %v160 = vand.u32 %v159, 4294901760
  %161 = vmatpush1.msra.mxu0 %v160
  %162 = vmatprep.subr.mxu0 0.0
  %v163 = vand.u32 %v29, 4294901760
  %v164 = vsub.f32 %v29, %v163
  %v165 = vand.u32 %v164, 4294901760
  %v166 = vsub.f32 %v164, %v165
  %v167 = vand.u32 %v166, 4294901760
  %168 = vmatpush1.msra.mxu0 %v167
  %169 = vmatprep.subr.mxu0 0.0
  %v170 = vand.u32 %v28, 4294901760
  %v171 = vsub.f32 %v28, %v170
  %v172 = vand.u32 %v171, 4294901760
  %v173 = vsub.f32 %v171, %v172
  %v174 = vand.u32 %v173, 4294901760
  %175 = vmatpush1.msra.mxu0 %v174
  %176 = vmatprep.subr.mxu0 0.0
  %v177 = vand.u32 %v27, 4294901760
  %v178 = vsub.f32 %v27, %v177
  %v179 = vand.u32 %v178, 4294901760
  %v180 = vsub.f32 %v178, %v179
  %v181 = vand.u32 %v180, 4294901760
  %182 = vmatpush1.msra.mxu0 %v181
  %183 = vmatprep.subr.mxu0 0.0
  %v184 = vand.u32 %v26, 4294901760
  %v185 = vsub.f32 %v26, %v184
  %v186 = vand.u32 %v185, 4294901760
  %v187 = vsub.f32 %v185, %v186
  %v188 = vand.u32 %v187, 4294901760
  %189 = vmatpush1.msra.mxu0 %v188
  %190 = vmatprep.subr.mxu0 0.0
  %v191 = vand.u32 %v25, 4294901760
  %v192 = vsub.f32 %v25, %v191
  %v193 = vand.u32 %v192, 4294901760
  %v194 = vsub.f32 %v192, %v193
  %v195 = vand.u32 %v194, 4294901760
  %196 = vmatpush1.msra.mxu0 %v195
  %197 = vmatprep.subr.mxu0 0.0
  %v198 = vand.u32 %v24, 4294901760
  %v199 = vsub.f32 %v24, %v198
  %v200 = vand.u32 %v199, 4294901760
  %v201 = vsub.f32 %v199, %v200
  %v202 = vand.u32 %v201, 4294901760
  %203 = vmatpush1.msra.mxu0 %v202
  %204 = vmatprep.subr.mxu0 0.0
  %v205 = vand.u32 %v23, 4294901760
  %v206 = vsub.f32 %v23, %v205
  %v207 = vand.u32 %v206, 4294901760
  %v208 = vsub.f32 %v206, %v207
  %v209 = vand.u32 %v208, 4294901760
  %210 = vmatpush1.msra.mxu0 %v209
  %211 = vmatprep.subr.mxu0 0.0
  %212 = vmatpush2.msra.mxu0 0.0
  %213 = vmatprep.subr.mxu0 0.0
  %214 = vmatpush2.msra.mxu0 0.0
  %215 = vmatprep.subr.mxu0 0.0
  %216 = vmatpush2.msra.mxu0 0.0
  %217 = vmatprep.subr.mxu0 0.0
  %218 = vmatpush2.msra.mxu0 0.0
  %219 = vmatprep.subr.mxu0 0.0
  %220 = vmatpush2.msra.mxu0 0.0
  %221 = vmatprep.subr.mxu0 0.0
  %222 = vmatpush2.msra.mxu0 0.0
  %223 = vmatprep.subr.mxu0 0.0
  %224 = vmatpush2.msra.mxu0 0.0
  %225 = vmatprep.subr.mxu0 0.0
  %226 = vmatpush2.msra.mxu0 0.0
  %227 = vmatprep.subr.mxu0 0.0
  %228 = vmatpush2.msra.mxu0 0.0
  %229 = vmatprep.subr.mxu0 0.0
  %230 = vmatpush2.msra.mxu0 0.0
  %231 = vmatprep.subr.mxu0 0.0
  %232 = vmatpush2.msra.mxu0 0.0
  %233 = vmatprep.subr.mxu0 0.0
  %234 = vmatpush2.msra.mxu0 0.0
  %235 = vmatprep.subr.mxu0 0.0
  %236 = vmatpush2.msra.mxu0 0.0
  %237 = vmatprep.subr.mxu0 0.0
  %238 = vmatpush2.msra.mxu0 0.0
  %239 = vmatprep.subr.mxu0 0.0
  %240 = vmatpush2.msra.mxu0 0.0
  %241 = vmatprep.subr.mxu0 0.0
  %242 = vmatpush2.msra.mxu0 0.0
  %243 = vmatprep.mubr.f32.mxu0 0.0
  %v244 = vand.u32 %v42, 4294901760
  %245 = vmatmul.mubr.f32.gmra.mxu0 %v244
  %v246 = vpop.f32.mrf.mxu0
  %v247 = vadd.f32 %v126, %v246
  %v248 = vpop.f32.mrf.mxu0
  %249 = vdwg.mxu0
  %250 = vmatprep.subr.mxu0 0.0
  %251 = vmatpush1.msra.mxu0 0.0
  %252 = vmatprep.subr.mxu0 0.0
  %253 = vmatpush1.msra.mxu0 0.0
  %254 = vmatprep.subr.mxu0 0.0
  %255 = vmatpush1.msra.mxu0 0.0
  %256 = vmatprep.subr.mxu0 0.0
  %257 = vmatpush1.msra.mxu0 0.0
  %258 = vmatprep.subr.mxu0 0.0
  %259 = vmatpush1.msra.mxu0 0.0
  %260 = vmatprep.subr.mxu0 0.0
  %261 = vmatpush1.msra.mxu0 0.0
  %262 = vmatprep.subr.mxu0 0.0
  %v263 = vand.u32 %v32, 4294901760
  %v264 = vsub.f32 %v32, %v263
  %265 = vmatpush1.msra.mxu0 %v264
  %266 = vmatprep.subr.mxu0 0.0
  %v267 = vand.u32 %v31, 4294901760
  %v268 = vsub.f32 %v31, %v267
  %269 = vmatpush1.msra.mxu0 %v268
  %270 = vmatprep.subr.mxu0 0.0
  %v271 = vand.u32 %v30, 4294901760
  %v272 = vsub.f32 %v30, %v271
  %273 = vmatpush1.msra.mxu0 %v272
  %274 = vmatprep.subr.mxu0 0.0
  %v275 = vand.u32 %v29, 4294901760
  %v276 = vsub.f32 %v29, %v275
  %277 = vmatpush1.msra.mxu0 %v276
  %278 = vmatprep.subr.mxu0 0.0
  %v279 = vand.u32 %v28, 4294901760
  %v280 = vsub.f32 %v28, %v279
  %281 = vmatpush1.msra.mxu0 %v280
  %282 = vmatprep.subr.mxu0 0.0
  %v283 = vand.u32 %v27, 4294901760
  %v284 = vsub.f32 %v27, %v283
  %285 = vmatpush1.msra.mxu0 %v284
  %286 = vmatprep.subr.mxu0 0.0
  %v287 = vand.u32 %v26, 4294901760
  %v288 = vsub.f32 %v26, %v287
  %289 = vmatpush1.msra.mxu0 %v288
  %290 = vmatprep.subr.mxu0 0.0
  %v291 = vand.u32 %v25, 4294901760
  %v292 = vsub.f32 %v25, %v291
  %293 = vmatpush1.msra.mxu0 %v292
  %294 = vmatprep.subr.mxu0 0.0
  %v295 = vand.u32 %v24, 4294901760
  %v296 = vsub.f32 %v24, %v295
  %297 = vmatpush1.msra.mxu0 %v296
  %298 = vmatprep.subr.mxu0 0.0
  %v299 = vand.u32 %v23, 4294901760
  %v300 = vsub.f32 %v23, %v299
  %301 = vmatpush1.msra.mxu0 %v300
  %302 = vmatprep.subr.mxu0 0.0
  %303 = vmatpush2.msra.mxu0 0.0
  %304 = vmatprep.subr.mxu0 0.0
  %305 = vmatpush2.msra.mxu0 0.0
  %306 = vmatprep.subr.mxu0 0.0
  %307 = vmatpush2.msra.mxu0 0.0
  %308 = vmatprep.subr.mxu0 0.0
  %309 = vmatpush2.msra.mxu0 0.0
  %310 = vmatprep.subr.mxu0 0.0
  %311 = vmatpush2.msra.mxu0 0.0
  %312 = vmatprep.subr.mxu0 0.0
  %313 = vmatpush2.msra.mxu0 0.0
  %314 = vmatprep.subr.mxu0 0.0
  %315 = vmatpush2.msra.mxu0 0.0
  %316 = vmatprep.subr.mxu0 0.0
  %317 = vmatpush2.msra.mxu0 0.0
  %318 = vmatprep.subr.mxu0 0.0
  %319 = vmatpush2.msra.mxu0 0.0
  %320 = vmatprep.subr.mxu0 0.0
  %321 = vmatpush2.msra.mxu0 0.0
  %322 = vmatprep.subr.mxu0 0.0
  %323 = vmatpush2.msra.mxu0 0.0
  %324 = vmatprep.subr.mxu0 0.0
  %325 = vmatpush2.msra.mxu0 0.0
  %326 = vmatprep.subr.mxu0 0.0
  %327 = vmatpush2.msra.mxu0 0.0
  %328 = vmatprep.subr.mxu0 0.0
  %329 = vmatpush2.msra.mxu0 0.0
  %330 = vmatprep.subr.mxu0 0.0
  %331 = vmatpush2.msra.mxu0 0.0
  %332 = vmatprep.subr.mxu0 0.0
  %333 = vmatpush2.msra.mxu0 0.0
  %334 = vmatprep.mubr.f32.mxu0 0.0
  %v335 = vand.u32 %v42, 4294901760
  %v336 = vsub.f32 %v42, %v335
  %337 = vmatmul.mubr.f32.gmra.mxu0 %v336
  %v338 = vpop.f32.mrf.mxu0
  %v339 = vadd.f32 %v247, %v338
  %v340 = vpop.f32.mrf.mxu0
  %341 = vdwg.mxu0
  %342 = vmatprep.subr.mxu0 0.0
  %343 = vmatpush1.msra.mxu0 0.0
  %344 = vmatprep.subr.mxu0 0.0
  %345 = vmatpush1.msra.mxu0 0.0
  %346 = vmatprep.subr.mxu0 0.0
  %347 = vmatpush1.msra.mxu0 0.0
  %348 = vmatprep.subr.mxu0 0.0
  %349 = vmatpush1.msra.mxu0 0.0
  %350 = vmatprep.subr.mxu0 0.0
  %351 = vmatpush1.msra.mxu0 0.0
  %352 = vmatprep.subr.mxu0 0.0
  %353 = vmatpush1.msra.mxu0 0.0
  %354 = vmatprep.subr.mxu0 0.0
  %v355 = vand.u32 %v32, 4294901760
  %356 = vmatpush1.msra.mxu0 %v355
  %357 = vmatprep.subr.mxu0 0.0
  %v358 = vand.u32 %v31, 4294901760
  %359 = vmatpush1.msra.mxu0 %v358
  %360 = vmatprep.subr.mxu0 0.0
  %v361 = vand.u32 %v30, 4294901760
  %362 = vmatpush1.msra.mxu0 %v361
  %363 = vmatprep.subr.mxu0 0.0
  %v364 = vand.u32 %v29, 4294901760
  %365 = vmatpush1.msra.mxu0 %v364
  %366 = vmatprep.subr.mxu0 0.0
  %v367 = vand.u32 %v28, 4294901760
  %368 = vmatpush1.msra.mxu0 %v367
  %369 = vmatprep.subr.mxu0 0.0
  %v370 = vand.u32 %v27, 4294901760
  %371 = vmatpush1.msra.mxu0 %v370
  %372 = vmatprep.subr.mxu0 0.0
  %v373 = vand.u32 %v26, 4294901760
  %374 = vmatpush1.msra.mxu0 %v373
  %375 = vmatprep.subr.mxu0 0.0
  %v376 = vand.u32 %v25, 4294901760
  %377 = vmatpush1.msra.mxu0 %v376
  %378 = vmatprep.subr.mxu0 0.0
  %v379 = vand.u32 %v24, 4294901760
  %380 = vmatpush1.msra.mxu0 %v379
  %381 = vmatprep.subr.mxu0 0.0
  %v382 = vand.u32 %v23, 4294901760
  %383 = vmatpush1.msra.mxu0 %v382
  %384 = vmatprep.subr.mxu0 0.0
  %385 = vmatpush2.msra.mxu0 0.0
  %386 = vmatprep.subr.mxu0 0.0
  %387 = vmatpush2.msra.mxu0 0.0
  %388 = vmatprep.subr.mxu0 0.0
  %389 = vmatpush2.msra.mxu0 0.0
  %390 = vmatprep.subr.mxu0 0.0
  %391 = vmatpush2.msra.mxu0 0.0
  %392 = vmatprep.subr.mxu0 0.0
  %393 = vmatpush2.msra.mxu0 0.0
  %394 = vmatprep.subr.mxu0 0.0
  %395 = vmatpush2.msra.mxu0 0.0
  %396 = vmatprep.subr.mxu0 0.0
  %397 = vmatpush2.msra.mxu0 0.0
  %398 = vmatprep.subr.mxu0 0.0
  %399 = vmatpush2.msra.mxu0 0.0
  %400 = vmatprep.subr.mxu0 0.0
  %401 = vmatpush2.msra.mxu0 0.0
  %402 = vmatprep.subr.mxu0 0.0
  %403 = vmatpush2.msra.mxu0 0.0
  %404 = vmatprep.subr.mxu0 0.0
  %405 = vmatpush2.msra.mxu0 0.0
  %406 = vmatprep.subr.mxu0 0.0
  %407 = vmatpush2.msra.mxu0 0.0
  %408 = vmatprep.subr.mxu0 0.0
  %409 = vmatpush2.msra.mxu0 0.0
  %410 = vmatprep.subr.mxu0 0.0
  %411 = vmatpush2.msra.mxu0 0.0
  %412 = vmatprep.subr.mxu0 0.0
  %413 = vmatpush2.msra.mxu0 0.0
  %414 = vmatprep.subr.mxu0 0.0
  %415 = vmatpush2.msra.mxu0 0.0
  %416 = vmatprep.mubr.f32.mxu0 0.0
  %v417 = vand.u32 %v42, 4294901760
  %v418 = vsub.f32 %v42, %v417
  %v419 = vand.u32 %v418, 4294901760
  %420 = vmatmul.mubr.f32.gmra.mxu0 %v419
  %v421 = vpop.f32.mrf.mxu0
  %v422 = vadd.f32 %v339, %v421
  %v423 = vpop.f32.mrf.mxu0
  %424 = vdwg.mxu0
  %425 = vmatprep.subr.mxu0 0.0
  %426 = vmatpush1.msra.mxu0 0.0
  %427 = vmatprep.subr.mxu0 0.0
  %428 = vmatpush1.msra.mxu0 0.0
  %429 = vmatprep.subr.mxu0 0.0
  %430 = vmatpush1.msra.mxu0 0.0
  %431 = vmatprep.subr.mxu0 0.0
  %432 = vmatpush1.msra.mxu0 0.0
  %433 = vmatprep.subr.mxu0 0.0
  %434 = vmatpush1.msra.mxu0 0.0
  %435 = vmatprep.subr.mxu0 0.0
  %436 = vmatpush1.msra.mxu0 0.0
  %437 = vmatprep.subr.mxu0 0.0
  %v438 = vand.u32 %v32, 4294901760
  %v439 = vsub.f32 %v32, %v438
  %v440 = vand.u32 %v439, 4294901760
  %441 = vmatpush1.msra.mxu0 %v440
  %442 = vmatprep.subr.mxu0 0.0
  %v443 = vand.u32 %v31, 4294901760
  %v444 = vsub.f32 %v31, %v443
  %v445 = vand.u32 %v444, 4294901760
  %446 = vmatpush1.msra.mxu0 %v445
  %447 = vmatprep.subr.mxu0 0.0
  %v448 = vand.u32 %v30, 4294901760
  %v449 = vsub.f32 %v30, %v448
  %v450 = vand.u32 %v449, 4294901760
  %451 = vmatpush1.msra.mxu0 %v450
  %452 = vmatprep.subr.mxu0 0.0
  %v453 = vand.u32 %v29, 4294901760
  %v454 = vsub.f32 %v29, %v453
  %v455 = vand.u32 %v454, 4294901760
  %456 = vmatpush1.msra.mxu0 %v455
  %457 = vmatprep.subr.mxu0 0.0
  %v458 = vand.u32 %v28, 4294901760
  %v459 = vsub.f32 %v28, %v458
  %v460 = vand.u32 %v459, 4294901760
  %461 = vmatpush1.msra.mxu0 %v460
  %462 = vmatprep.subr.mxu0 0.0
  %v463 = vand.u32 %v27, 4294901760
  %v464 = vsub.f32 %v27, %v463
  %v465 = vand.u32 %v464, 4294901760
  %466 = vmatpush1.msra.mxu0 %v465
  %467 = vmatprep.subr.mxu0 0.0
  %v468 = vand.u32 %v26, 4294901760
  %v469 = vsub.f32 %v26, %v468
  %v470 = vand.u32 %v469, 4294901760
  %471 = vmatpush1.msra.mxu0 %v470
  %472 = vmatprep.subr.mxu0 0.0
  %v473 = vand.u32 %v25, 4294901760
  %v474 = vsub.f32 %v25, %v473
  %v475 = vand.u32 %v474, 4294901760
  %476 = vmatpush1.msra.mxu0 %v475
  %477 = vmatprep.subr.mxu0 0.0
  %v478 = vand.u32 %v24, 4294901760
  %v479 = vsub.f32 %v24, %v478
  %v480 = vand.u32 %v479, 4294901760
  %481 = vmatpush1.msra.mxu0 %v480
  %482 = vmatprep.subr.mxu0 0.0
  %v483 = vand.u32 %v23, 4294901760
  %v484 = vsub.f32 %v23, %v483
  %v485 = vand.u32 %v484, 4294901760
  %486 = vmatpush1.msra.mxu0 %v485
  %487 = vmatprep.subr.mxu0 0.0
  %488 = vmatpush2.msra.mxu0 0.0
  %489 = vmatprep.subr.mxu0 0.0
  %490 = vmatpush2.msra.mxu0 0.0
  %491 = vmatprep.subr.mxu0 0.0
  %492 = vmatpush2.msra.mxu0 0.0
  %493 = vmatprep.subr.mxu0 0.0
  %494 = vmatpush2.msra.mxu0 0.0
  %495 = vmatprep.subr.mxu0 0.0
  %496 = vmatpush2.msra.mxu0 0.0
  %497 = vmatprep.subr.mxu0 0.0
  %498 = vmatpush2.msra.mxu0 0.0
  %499 = vmatprep.subr.mxu0 0.0
  %500 = vmatpush2.msra.mxu0 0.0
  %501 = vmatprep.subr.mxu0 0.0
  %502 = vmatpush2.msra.mxu0 0.0
  %503 = vmatprep.subr.mxu0 0.0
  %504 = vmatpush2.msra.mxu0 0.0
  %505 = vmatprep.subr.mxu0 0.0
  %506 = vmatpush2.msra.mxu0 0.0
  %507 = vmatprep.subr.mxu0 0.0
  %508 = vmatpush2.msra.mxu0 0.0
  %509 = vmatprep.subr.mxu0 0.0
  %510 = vmatpush2.msra.mxu0 0.0
  %511 = vmatprep.subr.mxu0 0.0
  %512 = vmatpush2.msra.mxu0 0.0
  %513 = vmatprep.subr.mxu0 0.0
  %514 = vmatpush2.msra.mxu0 0.0
  %515 = vmatprep.subr.mxu0 0.0
  %516 = vmatpush2.msra.mxu0 0.0
  %517 = vmatprep.subr.mxu0 0.0
  %518 = vmatpush2.msra.mxu0 0.0
  %519 = vmatprep.mubr.f32.mxu0 0.0
  %v520 = vand.u32 %v42, 4294901760
  %521 = vmatmul.mubr.f32.gmra.mxu0 %v520
  %v522 = vpop.f32.mrf.mxu0
  %v523 = vadd.f32 %v422, %v522
  %v524 = vpop.f32.mrf.mxu0
  %525 = vdwg.mxu0
  %526 = vmatprep.subr.mxu0 0.0
  %527 = vmatpush1.msra.mxu0 0.0
  %528 = vmatprep.subr.mxu0 0.0
  %529 = vmatpush1.msra.mxu0 0.0
  %530 = vmatprep.subr.mxu0 0.0
  %531 = vmatpush1.msra.mxu0 0.0
  %532 = vmatprep.subr.mxu0 0.0
  %533 = vmatpush1.msra.mxu0 0.0
  %534 = vmatprep.subr.mxu0 0.0
  %535 = vmatpush1.msra.mxu0 0.0
  %536 = vmatprep.subr.mxu0 0.0
  %537 = vmatpush1.msra.mxu0 0.0
  %538 = vmatprep.subr.mxu0 0.0
  %v539 = vand.u32 %v32, 4294901760
  %540 = vmatpush1.msra.mxu0 %v539
  %541 = vmatprep.subr.mxu0 0.0
  %v542 = vand.u32 %v31, 4294901760
  %543 = vmatpush1.msra.mxu0 %v542
  %544 = vmatprep.subr.mxu0 0.0
  %v545 = vand.u32 %v30, 4294901760
  %546 = vmatpush1.msra.mxu0 %v545
  %547 = vmatprep.subr.mxu0 0.0
  %v548 = vand.u32 %v29, 4294901760
  %549 = vmatpush1.msra.mxu0 %v548
  %550 = vmatprep.subr.mxu0 0.0
  %v551 = vand.u32 %v28, 4294901760
  %552 = vmatpush1.msra.mxu0 %v551
  %553 = vmatprep.subr.mxu0 0.0
  %v554 = vand.u32 %v27, 4294901760
  %555 = vmatpush1.msra.mxu0 %v554
  %556 = vmatprep.subr.mxu0 0.0
  %v557 = vand.u32 %v26, 4294901760
  %558 = vmatpush1.msra.mxu0 %v557
  %559 = vmatprep.subr.mxu0 0.0
  %v560 = vand.u32 %v25, 4294901760
  %561 = vmatpush1.msra.mxu0 %v560
  %562 = vmatprep.subr.mxu0 0.0
  %v563 = vand.u32 %v24, 4294901760
  %564 = vmatpush1.msra.mxu0 %v563
  %565 = vmatprep.subr.mxu0 0.0
  %v566 = vand.u32 %v23, 4294901760
  %567 = vmatpush1.msra.mxu0 %v566
  %568 = vmatprep.subr.mxu0 0.0
  %569 = vmatpush2.msra.mxu0 0.0
  %570 = vmatprep.subr.mxu0 0.0
  %571 = vmatpush2.msra.mxu0 0.0
  %572 = vmatprep.subr.mxu0 0.0
  %573 = vmatpush2.msra.mxu0 0.0
  %574 = vmatprep.subr.mxu0 0.0
  %575 = vmatpush2.msra.mxu0 0.0
  %576 = vmatprep.subr.mxu0 0.0
  %577 = vmatpush2.msra.mxu0 0.0
  %578 = vmatprep.subr.mxu0 0.0
  %579 = vmatpush2.msra.mxu0 0.0
  %580 = vmatprep.subr.mxu0 0.0
  %581 = vmatpush2.msra.mxu0 0.0
  %582 = vmatprep.subr.mxu0 0.0
  %583 = vmatpush2.msra.mxu0 0.0
  %584 = vmatprep.subr.mxu0 0.0
  %585 = vmatpush2.msra.mxu0 0.0
  %586 = vmatprep.subr.mxu0 0.0
  %587 = vmatpush2.msra.mxu0 0.0
  %588 = vmatprep.subr.mxu0 0.0
  %589 = vmatpush2.msra.mxu0 0.0
  %590 = vmatprep.subr.mxu0 0.0
  %591 = vmatpush2.msra.mxu0 0.0
  %592 = vmatprep.subr.mxu0 0.0
  %593 = vmatpush2.msra.mxu0 0.0
  %594 = vmatprep.subr.mxu0 0.0
  %595 = vmatpush2.msra.mxu0 0.0
  %596 = vmatprep.subr.mxu0 0.0
  %597 = vmatpush2.msra.mxu0 0.0
  %598 = vmatprep.subr.mxu0 0.0
  %599 = vmatpush2.msra.mxu0 0.0
  %600 = vmatprep.mubr.f32.mxu0 0.0
  %v601 = vand.u32 %v42, 4294901760
  %602 = vmatmul.mubr.f32.gmra.mxu0 %v601
  %v603 = vpop.f32.mrf.mxu0
  %v604 = vadd.f32 %v523, %v603
  %v605 = vpop.f32.mrf.mxu0
  %606 = vdwg.mxu0
  %v607 = vmax.f32 %v604, 0.0
  %v608 = vld [vmem:[%s2] sm:$0xff]
  %v609 = vld [vmem:[%s2 + $0x8] sm:$0xff]
  %v610 = vld [vmem:[%s2 + $0x10] sm:$0xff]
  %v611 = vld [vmem:[%s2 + $0x18] sm:$0xff]
  %v612 = vld [vmem:[%s2 + $0x20] sm:$0xff]
  %v613 = vld [vmem:[%s2 + $0x28] sm:$0xff]
  %v614 = vld [vmem:[%s2 + $0x30] sm:$0xff]
  %v615 = vld [vmem:[%s2 + $0x38] sm:$0xff]
  %v616 = vld [vmem:[%s2 + $0x40] sm:$0xff]
  %v617 = vld [vmem:[%s2 + $0x48] sm:$0xff]
  %v618 = vld [vmem:[#allocation2] sm:$0x1]
  %v620 = vlaneseq
  %v621 = vshrl.u32 %v620, 7
  %v622 = vsub.s32 0, %v621
  %v623 = vrot.slane %v618, %v622
  %624 = vset.pattern.permute.xlu0 0
  %625 = vperm.xlu0 %624, %v623
  %v626 = vpop.permute.xlu0 %625
  %v629 = vsel %vm40, %v607, 0
  %631 = vmatprep.subr.mxu0 0.0
  %632 = vmatpush1.msra.mxu0 0.0
  %633 = vmatprep.subr.mxu0 0.0
  %634 = vmatpush1.msra.mxu0 0.0
  %635 = vmatprep.subr.mxu0 0.0
  %636 = vmatpush1.msra.mxu0 0.0
  %637 = vmatprep.subr.mxu0 0.0
  %638 = vmatpush1.msra.mxu0 0.0
  %639 = vmatprep.subr.mxu0 0.0
  %640 = vmatpush1.msra.mxu0 0.0
  %641 = vmatprep.subr.mxu0 0.0
  %642 = vmatpush1.msra.mxu0 0.0
  %643 = vmatprep.subr.mxu0 0.0
  %v644 = vand.u32 %v617, 4294901760
  %645 = vmatpush1.msra.mxu0 %v644
  %646 = vmatprep.subr.mxu0 0.0
  %v647 = vand.u32 %v616, 4294901760
  %648 = vmatpush1.msra.mxu0 %v647
  %649 = vmatprep.subr.mxu0 0.0
  %v650 = vand.u32 %v615, 4294901760
  %651 = vmatpush1.msra.mxu0 %v650
  %652 = vmatprep.subr.mxu0 0.0
  %v653 = vand.u32 %v614, 4294901760
  %654 = vmatpush1.msra.mxu0 %v653
  %655 = vmatprep.subr.mxu0 0.0
  %v656 = vand.u32 %v613, 4294901760
  %657 = vmatpush1.msra.mxu0 %v656
  %658 = vmatprep.subr.mxu0 0.0
  %v659 = vand.u32 %v612, 4294901760
  %660 = vmatpush1.msra.mxu0 %v659
  %661 = vmatprep.subr.mxu0 0.0
  %v662 = vand.u32 %v611, 4294901760
  %663 = vmatpush1.msra.mxu0 %v662
  %664 = vmatprep.subr.mxu0 0.0
  %v665 = vand.u32 %v610, 4294901760
  %666 = vmatpush1.msra.mxu0 %v665
  %667 = vmatprep.subr.mxu0 0.0
  %v668 = vand.u32 %v609, 4294901760
  %669 = vmatpush1.msra.mxu0 %v668
  %670 = vmatprep.subr.mxu0 0.0
  %v671 = vand.u32 %v608, 4294901760
  %672 = vmatpush1.msra.mxu0 %v671
  %673 = vmatprep.subr.mxu0 0.0
  %674 = vmatpush2.msra.mxu0 0.0
  %675 = vmatprep.subr.mxu0 0.0
  %676 = vmatpush2.msra.mxu0 0.0
  %677 = vmatprep.subr.mxu0 0.0
  %678 = vmatpush2.msra.mxu0 0.0
  %679 = vmatprep.subr.mxu0 0.0
  %680 = vmatpush2.msra.mxu0 0.0
  %681 = vmatprep.subr.mxu0 0.0
  %682 = vmatpush2.msra.mxu0 0.0
  %683 = vmatprep.subr.mxu0 0.0
  %684 = vmatpush2.msra.mxu0 0.0
  %685 = vmatprep.subr.mxu0 0.0
  %686 = vmatpush2.msra.mxu0 0.0
  %687 = vmatprep.subr.mxu0 0.0
  %688 = vmatpush2.msra.mxu0 0.0
  %689 = vmatprep.subr.mxu0 0.0
  %690 = vmatpush2.msra.mxu0 0.0
  %691 = vmatprep.subr.mxu0 0.0
  %692 = vmatpush2.msra.mxu0 0.0
  %693 = vmatprep.subr.mxu0 0.0
  %694 = vmatpush2.msra.mxu0 0.0
  %695 = vmatprep.subr.mxu0 0.0
  %696 = vmatpush2.msra.mxu0 0.0
  %697 = vmatprep.subr.mxu0 0.0
  %698 = vmatpush2.msra.mxu0 0.0
  %699 = vmatprep.subr.mxu0 0.0
  %700 = vmatpush2.msra.mxu0 0.0
  %701 = vmatprep.subr.mxu0 0.0
  %702 = vmatpush2.msra.mxu0 0.0
  %703 = vmatprep.subr.mxu0 0.0
  %704 = vmatpush2.msra.mxu0 0.0
  %705 = vmatprep.mubr.f32.mxu0 0.0
  %v706 = vand.u32 %v629, 4294901760
  %v707 = vsub.f32 %v629, %v706
  %v708 = vand.u32 %v707, 4294901760
  %v709 = vsub.f32 %v707, %v708
  %v710 = vand.u32 %v709, 4294901760
  %711 = vmatmul.mubr.f32.gmra.mxu0 %v710
  %v712 = vpop.f32.mrf.mxu0
  %v713 = vadd.f32 %v626, %v712
  %v714 = vpop.f32.mrf.mxu0
  %715 = vdwg.mxu0
  %716 = vmatprep.subr.mxu0 0.0
  %717 = vmatpush1.msra.mxu0 0.0
  %718 = vmatprep.subr.mxu0 0.0
  %719 = vmatpush1.msra.mxu0 0.0
  %720 = vmatprep.subr.mxu0 0.0
  %721 = vmatpush1.msra.mxu0 0.0
  %722 = vmatprep.subr.mxu0 0.0
  %723 = vmatpush1.msra.mxu0 0.0
  %724 = vmatprep.subr.mxu0 0.0
  %725 = vmatpush1.msra.mxu0 0.0
  %726 = vmatprep.subr.mxu0 0.0
  %727 = vmatpush1.msra.mxu0 0.0
  %728 = vmatprep.subr.mxu0 0.0
  %v729 = vand.u32 %v617, 4294901760
  %v730 = vsub.f32 %v617, %v729
  %v731 = vand.u32 %v730, 4294901760
  %v732 = vsub.f32 %v730, %v731
  %v733 = vand.u32 %v732, 4294901760
  %734 = vmatpush1.msra.mxu0 %v733
  %735 = vmatprep.subr.mxu0 0.0
  %v736 = vand.u32 %v616, 4294901760
  %v737 = vsub.f32 %v616, %v736
  %v738 = vand.u32 %v737, 4294901760
  %v739 = vsub.f32 %v737, %v738
  %v740 = vand.u32 %v739, 4294901760
  %741 = vmatpush1.msra.mxu0 %v740
  %742 = vmatprep.subr.mxu0 0.0
  %v743 = vand.u32 %v615, 4294901760
  %v744 = vsub.f32 %v615, %v743
  %v745 = vand.u32 %v744, 4294901760
  %v746 = vsub.f32 %v744, %v745
  %v747 = vand.u32 %v746, 4294901760
  %748 = vmatpush1.msra.mxu0 %v747
  %749 = vmatprep.subr.mxu0 0.0
  %v750 = vand.u32 %v614, 4294901760
  %v751 = vsub.f32 %v614, %v750
  %v752 = vand.u32 %v751, 4294901760
  %v753 = vsub.f32 %v751, %v752
  %v754 = vand.u32 %v753, 4294901760
  %755 = vmatpush1.msra.mxu0 %v754
  %756 = vmatprep.subr.mxu0 0.0
  %v757 = vand.u32 %v613, 4294901760
  %v758 = vsub.f32 %v613, %v757
  %v759 = vand.u32 %v758, 4294901760
  %v760 = vsub.f32 %v758, %v759
  %v761 = vand.u32 %v760, 4294901760
  %762 = vmatpush1.msra.mxu0 %v761
  %763 = vmatprep.subr.mxu0 0.0
  %v764 = vand.u32 %v612, 4294901760
  %v765 = vsub.f32 %v612, %v764
  %v766 = vand.u32 %v765, 4294901760
  %v767 = vsub.f32 %v765, %v766
  %v768 = vand.u32 %v767, 4294901760
  %769 = vmatpush1.msra.mxu0 %v768
  %770 = vmatprep.subr.mxu0 0.0
  %v771 = vand.u32 %v611, 4294901760
  %v772 = vsub.f32 %v611, %v771
  %v773 = vand.u32 %v772, 4294901760
  %v774 = vsub.f32 %v772, %v773
  %v775 = vand.u32 %v774, 4294901760
  %776 = vmatpush1.msra.mxu0 %v775
  %777 = vmatprep.subr.mxu0 0.0
  %v778 = vand.u32 %v610, 4294901760
  %v779 = vsub.f32 %v610, %v778
  %v780 = vand.u32 %v779, 4294901760
  %v781 = vsub.f32 %v779, %v780
  %v782 = vand.u32 %v781, 4294901760
  %783 = vmatpush1.msra.mxu0 %v782
  %784 = vmatprep.subr.mxu0 0.0
  %v785 = vand.u32 %v609, 4294901760
  %v786 = vsub.f32 %v609, %v785
  %v787 = vand.u32 %v786, 4294901760
  %v788 = vsub.f32 %v786, %v787
  %v789 = vand.u32 %v788, 4294901760
  %790 = vmatpush1.msra.mxu0 %v789
  %791 = vmatprep.subr.mxu0 0.0
  %v792 = vand.u32 %v608, 4294901760
  %v793 = vsub.f32 %v608, %v792
  %v794 = vand.u32 %v793, 4294901760
  %v795 = vsub.f32 %v793, %v794
  %v796 = vand.u32 %v795, 4294901760
  %797 = vmatpush1.msra.mxu0 %v796
  %798 = vmatprep.subr.mxu0 0.0
  %799 = vmatpush2.msra.mxu0 0.0
  %800 = vmatprep.subr.mxu0 0.0
  %801 = vmatpush2.msra.mxu0 0.0
  %802 = vmatprep.subr.mxu0 0.0
  %803 = vmatpush2.msra.mxu0 0.0
  %804 = vmatprep.subr.mxu0 0.0
  %805 = vmatpush2.msra.mxu0 0.0
  %806 = vmatprep.subr.mxu0 0.0
  %807 = vmatpush2.msra.mxu0 0.0
  %808 = vmatprep.subr.mxu0 0.0
  %809 = vmatpush2.msra.mxu0 0.0
  %810 = vmatprep.subr.mxu0 0.0
  %811 = vmatpush2.msra.mxu0 0.0
  %812 = vmatprep.subr.mxu0 0.0
  %813 = vmatpush2.msra.mxu0 0.0
  %814 = vmatprep.subr.mxu0 0.0
  %815 = vmatpush2.msra.mxu0 0.0
  %816 = vmatprep.subr.mxu0 0.0
  %817 = vmatpush2.msra.mxu0 0.0
  %818 = vmatprep.subr.mxu0 0.0
  %819 = vmatpush2.msra.mxu0 0.0
  %820 = vmatprep.subr.mxu0 0.0
  %821 = vmatpush2.msra.mxu0 0.0
  %822 = vmatprep.subr.mxu0 0.0
  %823 = vmatpush2.msra.mxu0 0.0
  %824 = vmatprep.subr.mxu0 0.0
  %825 = vmatpush2.msra.mxu0 0.0
  %826 = vmatprep.subr.mxu0 0.0
  %827 = vmatpush2.msra.mxu0 0.0
  %828 = vmatprep.subr.mxu0 0.0
  %829 = vmatpush2.msra.mxu0 0.0
  %830 = vmatprep.mubr.f32.mxu0 0.0
  %v831 = vand.u32 %v629, 4294901760
  %832 = vmatmul.mubr.f32.gmra.mxu0 %v831
  %v833 = vpop.f32.mrf.mxu0
  %v834 = vadd.f32 %v713, %v833
  %v835 = vpop.f32.mrf.mxu0
  %836 = vdwg.mxu0
  %837 = vmatprep.subr.mxu0 0.0
  %838 = vmatpush1.msra.mxu0 0.0
  %839 = vmatprep.subr.mxu0 0.0
  %840 = vmatpush1.msra.mxu0 0.0
  %841 = vmatprep.subr.mxu0 0.0
  %842 = vmatpush1.msra.mxu0 0.0
  %843 = vmatprep.subr.mxu0 0.0
  %844 = vmatpush1.msra.mxu0 0.0
  %845 = vmatprep.subr.mxu0 0.0
  %846 = vmatpush1.msra.mxu0 0.0
  %847 = vmatprep.subr.mxu0 0.0
  %848 = vmatpush1.msra.mxu0 0.0
  %849 = vmatprep.subr.mxu0 0.0
  %v850 = vand.u32 %v617, 4294901760
  %v851 = vsub.f32 %v617, %v850
  %852 = vmatpush1.msra.mxu0 %v851
  %853 = vmatprep.subr.mxu0 0.0
  %v854 = vand.u32 %v616, 4294901760
  %v855 = vsub.f32 %v616, %v854
  %856 = vmatpush1.msra.mxu0 %v855
  %857 = vmatprep.subr.mxu0 0.0
  %v858 = vand.u32 %v615, 4294901760
  %v859 = vsub.f32 %v615, %v858
  %860 = vmatpush1.msra.mxu0 %v859
  %861 = vmatprep.subr.mxu0 0.0
  %v862 = vand.u32 %v614, 4294901760
  %v863 = vsub.f32 %v614, %v862
  %864 = vmatpush1.msra.mxu0 %v863
  %865 = vmatprep.subr.mxu0 0.0
  %v866 = vand.u32 %v613, 4294901760
  %v867 = vsub.f32 %v613, %v866
  %868 = vmatpush1.msra.mxu0 %v867
  %869 = vmatprep.subr.mxu0 0.0
  %v870 = vand.u32 %v612, 4294901760
  %v871 = vsub.f32 %v612, %v870
  %872 = vmatpush1.msra.mxu0 %v871
  %873 = vmatprep.subr.mxu0 0.0
  %v874 = vand.u32 %v611, 4294901760
  %v875 = vsub.f32 %v611, %v874
  %876 = vmatpush1.msra.mxu0 %v875
  %877 = vmatprep.subr.mxu0 0.0
  %v878 = vand.u32 %v610, 4294901760
  %v879 = vsub.f32 %v610, %v878
  %880 = vmatpush1.msra.mxu0 %v879
  %881 = vmatprep.subr.mxu0 0.0
  %v882 = vand.u32 %v609, 4294901760
  %v883 = vsub.f32 %v609, %v882
  %884 = vmatpush1.msra.mxu0 %v883
  %885 = vmatprep.subr.mxu0 0.0
  %v886 = vand.u32 %v608, 4294901760
  %v887 = vsub.f32 %v608, %v886
  %888 = vmatpush1.msra.mxu0 %v887
  %889 = vmatprep.subr.mxu0 0.0
  %890 = vmatpush2.msra.mxu0 0.0
  %891 = vmatprep.subr.mxu0 0.0
  %892 = vmatpush2.msra.mxu0 0.0
  %893 = vmatprep.subr.mxu0 0.0
  %894 = vmatpush2.msra.mxu0 0.0
  %895 = vmatprep.subr.mxu0 0.0
  %896 = vmatpush2.msra.mxu0 0.0
  %897 = vmatprep.subr.mxu0 0.0
  %898 = vmatpush2.msra.mxu0 0.0
  %899 = vmatprep.subr.mxu0 0.0
  %900 = vmatpush2.msra.mxu0 0.0
  %901 = vmatprep.subr.mxu0 0.0
  %902 = vmatpush2.msra.mxu0 0.0
  %903 = vmatprep.subr.mxu0 0.0
  %904 = vmatpush2.msra.mxu0 0.0
  %905 = vmatprep.subr.mxu0 0.0
  %906 = vmatpush2.msra.mxu0 0.0
  %907 = vmatprep.subr.mxu0 0.0
  %908 = vmatpush2.msra.mxu0 0.0
  %909 = vmatprep.subr.mxu0 0.0
  %910 = vmatpush2.msra.mxu0 0.0
  %911 = vmatprep.subr.mxu0 0.0
  %912 = vmatpush2.msra.mxu0 0.0
  %913 = vmatprep.subr.mxu0 0.0
  %914 = vmatpush2.msra.mxu0 0.0
  %915 = vmatprep.subr.mxu0 0.0
  %916 = vmatpush2.msra.mxu0 0.0
  %917 = vmatprep.subr.mxu0 0.0
  %918 = vmatpush2.msra.mxu0 0.0
  %919 = vmatprep.subr.mxu0 0.0
  %920 = vmatpush2.msra.mxu0 0.0
  %921 = vmatprep.mubr.f32.mxu0 0.0
  %v922 = vand.u32 %v629, 4294901760
  %v923 = vsub.f32 %v629, %v922
  %924 = vmatmul.mubr.f32.gmra.mxu0 %v923
  %v925 = vpop.f32.mrf.mxu0
  %v926 = vadd.f32 %v834, %v925
  %v927 = vpop.f32.mrf.mxu0
  %928 = vdwg.mxu0
  %929 = vmatprep.subr.mxu0 0.0
  %930 = vmatpush1.msra.mxu0 0.0
  %931 = vmatprep.subr.mxu0 0.0
  %932 = vmatpush1.msra.mxu0 0.0
  %933 = vmatprep.subr.mxu0 0.0
  %934 = vmatpush1.msra.mxu0 0.0
  %935 = vmatprep.subr.mxu0 0.0
  %936 = vmatpush1.msra.mxu0 0.0
  %937 = vmatprep.subr.mxu0 0.0
  %938 = vmatpush1.msra.mxu0 0.0
  %939 = vmatprep.subr.mxu0 0.0
  %940 = vmatpush1.msra.mxu0 0.0
  %941 = vmatprep.subr.mxu0 0.0
  %v942 = vand.u32 %v617, 4294901760
  %943 = vmatpush1.msra.mxu0 %v942
  %944 = vmatprep.subr.mxu0 0.0
  %v945 = vand.u32 %v616, 4294901760
  %946 = vmatpush1.msra.mxu0 %v945
  %947 = vmatprep.subr.mxu0 0.0
  %v948 = vand.u32 %v615, 4294901760
  %949 = vmatpush1.msra.mxu0 %v948
  %950 = vmatprep.subr.mxu0 0.0
  %v951 = vand.u32 %v614, 4294901760
  %952 = vmatpush1.msra.mxu0 %v951
  %953 = vmatprep.subr.mxu0 0.0
  %v954 = vand.u32 %v613, 4294901760
  %955 = vmatpush1.msra.mxu0 %v954
  %956 = vmatprep.subr.mxu0 0.0
  %v957 = vand.u32 %v612, 4294901760
  %958 = vmatpush1.msra.mxu0 %v957
  %959 = vmatprep.subr.mxu0 0.0
  %v960 = vand.u32 %v611, 4294901760
  %961 = vmatpush1.msra.mxu0 %v960
  %962 = vmatprep.subr.mxu0 0.0
  %v963 = vand.u32 %v610, 4294901760
  %964 = vmatpush1.msra.mxu0 %v963
  %965 = vmatprep.subr.mxu0 0.0
  %v966 = vand.u32 %v609, 4294901760
  %967 = vmatpush1.msra.mxu0 %v966
  %968 = vmatprep.subr.mxu0 0.0
  %v969 = vand.u32 %v608, 4294901760
  %970 = vmatpush1.msra.mxu0 %v969
  %971 = vmatprep.subr.mxu0 0.0
  %972 = vmatpush2.msra.mxu0 0.0
  %973 = vmatprep.subr.mxu0 0.0
  %974 = vmatpush2.msra.mxu0 0.0
  %975 = vmatprep.subr.mxu0 0.0
  %976 = vmatpush2.msra.mxu0 0.0
  %977 = vmatprep.subr.mxu0 0.0
  %978 = vmatpush2.msra.mxu0 0.0
  %979 = vmatprep.subr.mxu0 0.0
  %980 = vmatpush2.msra.mxu0 0.0
  %981 = vmatprep.subr.mxu0 0.0
  %982 = vmatpush2.msra.mxu0 0.0
  %983 = vmatprep.subr.mxu0 0.0
  %984 = vmatpush2.msra.mxu0 0.0
  %985 = vmatprep.subr.mxu0 0.0
  %986 = vmatpush2.msra.mxu0 0.0
  %987 = vmatprep.subr.mxu0 0.0
  %988 = vmatpush2.msra.mxu0 0.0
  %989 = vmatprep.subr.mxu0 0.0
  %990 = vmatpush2.msra.mxu0 0.0
  %991 = vmatprep.subr.mxu0 0.0
  %992 = vmatpush2.msra.mxu0 0.0
  %993 = vmatprep.subr.mxu0 0.0
  %994 = vmatpush2.msra.mxu0 0.0
  %995 = vmatprep.subr.mxu0 0.0
  %996 = vmatpush2.msra.mxu0 0.0
  %997 = vmatprep.subr.mxu0 0.0
  %998 = vmatpush2.msra.mxu0 0.0
  %999 = vmatprep.subr.mxu0 0.0
  %1000 = vmatpush2.msra.mxu0 0.0
  %1001 = vmatprep.subr.mxu0 0.0
  %1002 = vmatpush2.msra.mxu0 0.0
  %1003 = vmatprep.mubr.f32.mxu0 0.0
  %v1004 = vand.u32 %v629, 4294901760
  %v1005 = vsub.f32 %v629, %v1004
  %v1006 = vand.u32 %v1005, 4294901760
  %1007 = vmatmul.mubr.f32.gmra.mxu0 %v1006
  %v1008 = vpop.f32.mrf.mxu0
  %v1009 = vadd.f32 %v926, %v1008
  %v1010 = vpop.f32.mrf.mxu0
  %1011 = vdwg.mxu0
  %1012 = vmatprep.subr.mxu0 0.0
  %1013 = vmatpush1.msra.mxu0 0.0
  %1014 = vmatprep.subr.mxu0 0.0
  %1015 = vmatpush1.msra.mxu0 0.0
  %1016 = vmatprep.subr.mxu0 0.0
  %1017 = vmatpush1.msra.mxu0 0.0
  %1018 = vmatprep.subr.mxu0 0.0
  %1019 = vmatpush1.msra.mxu0 0.0
  %1020 = vmatprep.subr.mxu0 0.0
  %1021 = vmatpush1.msra.mxu0 0.0
  %1022 = vmatprep.subr.mxu0 0.0
  %1023 = vmatpush1.msra.mxu0 0.0
  %1024 = vmatprep.subr.mxu0 0.0
  %v1025 = vand.u32 %v617, 4294901760
  %v1026 = vsub.f32 %v617, %v1025
  %v1027 = vand.u32 %v1026, 4294901760
  %1028 = vmatpush1.msra.mxu0 %v1027
  %1029 = vmatprep.subr.mxu0 0.0
  %v1030 = vand.u32 %v616, 4294901760
  %v1031 = vsub.f32 %v616, %v1030
  %v1032 = vand.u32 %v1031, 4294901760
  %1033 = vmatpush1.msra.mxu0 %v1032
  %1034 = vmatprep.subr.mxu0 0.0
  %v1035 = vand.u32 %v615, 4294901760
  %v1036 = vsub.f32 %v615, %v1035
  %v1037 = vand.u32 %v1036, 4294901760
  %1038 = vmatpush1.msra.mxu0 %v1037
  %1039 = vmatprep.subr.mxu0 0.0
  %v1040 = vand.u32 %v614, 4294901760
  %v1041 = vsub.f32 %v614, %v1040
  %v1042 = vand.u32 %v1041, 4294901760
  %1043 = vmatpush1.msra.mxu0 %v1042
  %1044 = vmatprep.subr.mxu0 0.0
  %v1045 = vand.u32 %v613, 4294901760
  %v1046 = vsub.f32 %v613, %v1045
  %v1047 = vand.u32 %v1046, 4294901760
  %1048 = vmatpush1.msra.mxu0 %v1047
  %1049 = vmatprep.subr.mxu0 0.0
  %v1050 = vand.u32 %v612, 4294901760
  %v1051 = vsub.f32 %v612, %v1050
  %v1052 = vand.u32 %v1051, 4294901760
  %1053 = vmatpush1.msra.mxu0 %v1052
  %1054 = vmatprep.subr.mxu0 0.0
  %v1055 = vand.u32 %v611, 4294901760
  %v1056 = vsub.f32 %v611, %v1055
  %v1057 = vand.u32 %v1056, 4294901760
  %1058 = vmatpush1.msra.mxu0 %v1057
  %1059 = vmatprep.subr.mxu0 0.0
  %v1060 = vand.u32 %v610, 4294901760
  %v1061 = vsub.f32 %v610, %v1060
  %v1062 = vand.u32 %v1061, 4294901760
  %1063 = vmatpush1.msra.mxu0 %v1062
  %1064 = vmatprep.subr.mxu0 0.0
  %v1065 = vand.u32 %v609, 4294901760
  %v1066 = vsub.f32 %v609, %v1065
  %v1067 = vand.u32 %v1066, 4294901760
  %1068 = vmatpush1.msra.mxu0 %v1067
  %1069 = vmatprep.subr.mxu0 0.0
  %v1070 = vand.u32 %v608, 4294901760
  %v1071 = vsub.f32 %v608, %v1070
  %v1072 = vand.u32 %v1071, 4294901760
  %1073 = vmatpush1.msra.mxu0 %v1072
  %1074 = vmatprep.subr.mxu0 0.0
  %1075 = vmatpush2.msra.mxu0 0.0
  %1076 = vmatprep.subr.mxu0 0.0
  %1077 = vmatpush2.msra.mxu0 0.0
  %1078 = vmatprep.subr.mxu0 0.0
  %1079 = vmatpush2.msra.mxu0 0.0
  %1080 = vmatprep.subr.mxu0 0.0
  %1081 = vmatpush2.msra.mxu0 0.0
  %1082 = vmatprep.subr.mxu0 0.0
  %1083 = vmatpush2.msra.mxu0 0.0
  %1084 = vmatprep.subr.mxu0 0.0
  %1085 = vmatpush2.msra.mxu0 0.0
  %1086 = vmatprep.subr.mxu0 0.0
  %1087 = vmatpush2.msra.mxu0 0.0
  %1088 = vmatprep.subr.mxu0 0.0
  %1089 = vmatpush2.msra.mxu0 0.0
  %1090 = vmatprep.subr.mxu0 0.0
  %1091 = vmatpush2.msra.mxu0 0.0
  %1092 = vmatprep.subr.mxu0 0.0
  %1093 = vmatpush2.msra.mxu0 0.0
  %1094 = vmatprep.subr.mxu0 0.0
  %1095 = vmatpush2.msra.mxu0 0.0
  %1096 = vmatprep.subr.mxu0 0.0
  %1097 = vmatpush2.msra.mxu0 0.0
  %1098 = vmatprep.subr.mxu0 0.0
  %1099 = vmatpush2.msra.mxu0 0.0
  %1100 = vmatprep.subr.mxu0 0.0
  %1101 = vmatpush2.msra.mxu0 0.0
  %1102 = vmatprep.subr.mxu0 0.0
  %1103 = vmatpush2.msra.mxu0 0.0
  %1104 = vmatprep.subr.mxu0 0.0
  %1105 = vmatpush2.msra.mxu0 0.0
  %1106 = vmatprep.mubr.f32.mxu0 0.0
  %v1107 = vand.u32 %v629, 4294901760
  %1108 = vmatmul.mubr.f32.gmra.mxu0 %v1107
  %v1109 = vpop.f32.mrf.mxu0
  %v1110 = vadd.f32 %v1009, %v1109
  %v1111 = vpop.f32.mrf.mxu0
  %1112 = vdwg.mxu0
  %1113 = vmatprep.subr.mxu0 0.0
  %1114 = vmatpush1.msra.mxu0 0.0
  %1115 = vmatprep.subr.mxu0 0.0
  %1116 = vmatpush1.msra.mxu0 0.0
  %1117 = vmatprep.subr.mxu0 0.0
  %1118 = vmatpush1.msra.mxu0 0.0
  %1119 = vmatprep.subr.mxu0 0.0
  %1120 = vmatpush1.msra.mxu0 0.0
  %1121 = vmatprep.subr.mxu0 0.0
  %1122 = vmatpush1.msra.mxu0 0.0
  %1123 = vmatprep.subr.mxu0 0.0
  %1124 = vmatpush1.msra.mxu0 0.0
  %1125 = vmatprep.subr.mxu0 0.0
  %v1126 = vand.u32 %v617, 4294901760
  %1127 = vmatpush1.msra.mxu0 %v1126
  %1128 = vmatprep.subr.mxu0 0.0
  %v1129 = vand.u32 %v616, 4294901760
  %1130 = vmatpush1.msra.mxu0 %v1129
  %1131 = vmatprep.subr.mxu0 0.0
  %v1132 = vand.u32 %v615, 4294901760
  %1133 = vmatpush1.msra.mxu0 %v1132
  %1134 = vmatprep.subr.mxu0 0.0
  %v1135 = vand.u32 %v614, 4294901760
  %1136 = vmatpush1.msra.mxu0 %v1135
  %1137 = vmatprep.subr.mxu0 0.0
  %v1138 = vand.u32 %v613, 4294901760
  %1139 = vmatpush1.msra.mxu0 %v1138
  %1140 = vmatprep.subr.mxu0 0.0
  %v1141 = vand.u32 %v612, 4294901760
  %1142 = vmatpush1.msra.mxu0 %v1141
  %1143 = vmatprep.subr.mxu0 0.0
  %v1144 = vand.u32 %v611, 4294901760
  %1145 = vmatpush1.msra.mxu0 %v1144
  %1146 = vmatprep.subr.mxu0 0.0
  %v1147 = vand.u32 %v610, 4294901760
  %1148 = vmatpush1.msra.mxu0 %v1147
  %1149 = vmatprep.subr.mxu0 0.0
  %v1150 = vand.u32 %v609, 4294901760
  %1151 = vmatpush1.msra.mxu0 %v1150
  %1152 = vmatprep.subr.mxu0 0.0
  %v1153 = vand.u32 %v608, 4294901760
  %1154 = vmatpush1.msra.mxu0 %v1153
  %1155 = vmatprep.subr.mxu0 0.0
  %1156 = vmatpush2.msra.mxu0 0.0
  %1157 = vmatprep.subr.mxu0 0.0
  %1158 = vmatpush2.msra.mxu0 0.0
  %1159 = vmatprep.subr.mxu0 0.0
  %1160 = vmatpush2.msra.mxu0 0.0
  %1161 = vmatprep.subr.mxu0 0.0
  %1162 = vmatpush2.msra.mxu0 0.0
  %1163 = vmatprep.subr.mxu0 0.0
  %1164 = vmatpush2.msra.mxu0 0.0
  %1165 = vmatprep.subr.mxu0 0.0
  %1166 = vmatpush2.msra.mxu0 0.0
  %1167 = vmatprep.subr.mxu0 0.0
  %1168 = vmatpush2.msra.mxu0 0.0
  %1169 = vmatprep.subr.mxu0 0.0
  %1170 = vmatpush2.msra.mxu0 0.0
  %1171 = vmatprep.subr.mxu0 0.0
  %1172 = vmatpush2.msra.mxu0 0.0
  %1173 = vmatprep.subr.mxu0 0.0
  %1174 = vmatpush2.msra.mxu0 0.0
  %1175 = vmatprep.subr.mxu0 0.0
  %1176 = vmatpush2.msra.mxu0 0.0
  %1177 = vmatprep.subr.mxu0 0.0
  %1178 = vmatpush2.msra.mxu0 0.0
  %1179 = vmatprep.subr.mxu0 0.0
  %1180 = vmatpush2.msra.mxu0 0.0
  %1181 = vmatprep.subr.mxu0 0.0
  %1182 = vmatpush2.msra.mxu0 0.0
  %1183 = vmatprep.subr.mxu0 0.0
  %1184 = vmatpush2.msra.mxu0 0.0
  %1185 = vmatprep.subr.mxu0 0.0
  %1186 = vmatpush2.msra.mxu0 0.0
  %1187 = vmatprep.mubr.f32.mxu0 0.0
  %v1188 = vand.u32 %v629, 4294901760
  %1189 = vmatmul.mubr.f32.gmra.mxu0 %v1188
  %v1190 = vpop.f32.mrf.mxu0
  %v1191 = vadd.f32 %v1110, %v1190
  %v1192 = vpop.f32.mrf.mxu0
  %1193 = vdwg.mxu0
  %vm1194 = vcmask 130048
  %1195 = vst.msk [vmem:[%s5] sm:$0xff] %vm1194, %v1191
  // Predicated region
  $region22: #{nn_model1_forward.1} parent=0 // pred_check
    _
  $region23: #{nn_model1_forward.1} parent=0 // pred_check_branch
    %1197 = sbr.rel (0) target = $region25
  $region24: #{nn_model1_forward.1} parent=0 // pred_region
    _
  $region25: #{nn_model1_forward.1} parent=0 // pred_fallthru
    _
  // Predicated region
  $region26: #{nn_model1_forward.1} parent=0 // pred_check
    _
  $region27: #{nn_model1_forward.1} parent=0 // pred_check_branch
    %1199 = sbr.rel (0) target = $region29
  $region28: #{nn_model1_forward.1} parent=0 // pred_region
    _
  $region29: #{nn_model1_forward.1} parent=0 // pred_fallthru
    _

</llo_original>
